<compile_context>
chip_gen: v5e
topology: v5e:2x2
jax: 0.10.0
libtpu: 0.0.40
codegen_flags: <defaults>
</compile_context>

<pallas_src>
import functools
import math

import jax
import jax.numpy as jnp
from jax.experimental import pallas as pl
from jax.experimental.pallas import tpu as pltpu


def _maxpool3x3_flat_kernel(x_ref, o_ref, *, plane_h, plane_w):
    x = x_ref[...]                         # (Rt, Wp); each row holds k whole planes
    Rt, Wp = x.shape
    L = plane_h * plane_w

    if jnp.issubdtype(x.dtype, jnp.floating):
        neg = jnp.array(-jnp.inf, dtype=x.dtype)
    else:
        neg = jnp.array(jnp.iinfo(x.dtype).min, dtype=x.dtype)

    # Narrow (1, Wp) column masks, broadcast by `where` (low VALU + vreg cost).
    col = jax.lax.broadcasted_iota(jnp.int32, (1, Wp), 1)
    w_in = col % plane_w                       # column within the plane
    off = col % L if Wp != L else col          # flat offset within the plane
    has_l = w_in > 0
    has_r = w_in < plane_w - 1
    has_u = off >= plane_w                     # h > 0
    has_d = off < L - plane_w                  # h < H - 1

    # --- horizontal 3-tap max: lane rolls by +/-1 ---
    lt = pltpu.roll(x, shift=1, axis=1)        # lt[., c] = x[., c-1]  (wraps; masked)
    rt = pltpu.roll(x, shift=Wp - 1, axis=1)   # rt[., c] = x[., c+1]  (wraps; masked)
    hm = jnp.maximum(
        x,
        jnp.maximum(jnp.where(has_l, lt, neg), jnp.where(has_r, rt, neg)))

    # --- vertical 3-tap max: lane rolls by +/-W (rows are W apart in flat layout) ---
    up = pltpu.roll(hm, shift=plane_w, axis=1)        # up[., c] = hm[., c-W]
    dn = pltpu.roll(hm, shift=Wp - plane_w, axis=1)   # dn[., c] = hm[., c+W]
    out = jnp.maximum(
        hm,
        jnp.maximum(jnp.where(has_u, up, neg), jnp.where(has_d, dn, neg)))

    o_ref[...] = out.astype(o_ref.dtype)


def _tensorcores_per_chip():
    """2 for v7x (dual TensorCore), 1 for v5e/v6e; safe fallback = 1."""
    try:
        kind = jax.devices()[0].device_kind.lower()
    except Exception:
        return 1
    return 2 if ("v7" in kind or "7x" in kind) else 1


def _planes_per_row(B, L):
    """Smallest k dividing B with (k*L) % 128 == 0 (lane-dense rows, copy-free)."""
    k0 = 128 // math.gcd(L, 128)          # minimal k making k*L a multiple of 128
    if B % k0 == 0:
        return k0
    # Fallback (rare: B has no suitable divisor) -> stay copy-free, accept
    # partially masked stores.
    for k in range(min(k0, B), 0, -1):
        if B % k == 0:
            return k
    return 1


def _rows_per_block(R, Wp, itemsize, *, sublane, num_cores, target_bytes=4 << 20):
    """Pick rows-per-block: multiple of `sublane`, divides R, <= ~target_bytes.

    Single-TC chips (v5e/v6e): use the single largest block that fits -- every
    extra grid step is ~0.35us of pure overhead.  Dual-TC (v7x): prefer a block
    count that is a multiple of num_cores so ("parallel",) shards evenly.
    """
    if R % sublane != 0 or R <= sublane:
        return R                              # full-extent block (always legal)
    n_units = R // sublane
    bytes_per_unit = sublane * Wp * itemsize
    upb = max(1, min(n_units, target_bytes // bytes_per_unit))
    while n_units % upb != 0:                 # equal-sized blocks only
        upb -= 1
    if num_cores > 1 and n_units % num_cores == 0:
        if (n_units // upb) % num_cores != 0:
            for cand in range(min(upb, n_units // num_cores), 0, -1):
                if n_units % cand == 0 and (n_units // cand) % num_cores == 0:
                    upb = cand
                    break
    return upb * sublane


def dvs_pooling_forward(x):
    """MaxPool3d((1,3,3), stride 1, padding (0,1,1)) on NCDHW input."""
    N, C, D, H, W = x.shape
    B = N * C * D
    L = H * W
    dtype = x.dtype
    itemsize = jnp.dtype(dtype).itemsize

    k = _planes_per_row(B, L)                 # planes packed per row (lane-dense)
    R = B // k
    Wp = k * L

    # Pure reshape of contiguous dims -> no HBM copy (unlike a transpose).
    xp = x.reshape(R, Wp)

    sublane = max(8, 32 // itemsize)          # dtype-aware sublane unit (8/16/32)
    Rt = _rows_per_block(R, Wp, itemsize, sublane=sublane,
                         num_cores=_tensorcores_per_chip())
    grid = (R // Rt,)

    yp = pl.pallas_call(
        functools.partial(_maxpool3x3_flat_kernel, plane_h=H, plane_w=W),
        out_shape=jax.ShapeDtypeStruct((R, Wp), dtype),
        grid_spec=pltpu.PrefetchScalarGridSpec(
            num_scalar_prefetch=0,
            grid=grid,
            in_specs=[pl.BlockSpec((Rt, Wp), lambda i: (i, 0))],
            out_specs=pl.BlockSpec((Rt, Wp), lambda i: (i, 0)),
        ),
        compiler_params=pltpu.CompilerParams(
            dimension_semantics=("parallel",),
            vmem_limit_bytes=32 << 20,        # 4 live ~4MiB buffers + headroom
        ),
        cost_estimate=pl.CostEstimate(
            flops=8 * R * Wp,                 # ~8 max/select ops per output element
            transcendentals=0,
            bytes_accessed=2 * R * Wp * itemsize,
        ),
    )(xp)

    return yp.reshape(N, C, D, H, W)          # pure reshape, no copy


def _reference(x):
    return jax.lax.reduce_window(
        x,
        -jnp.inf,
        jax.lax.max,
        window_dimensions=(1, 1, 1, 3, 3),
        window_strides=(1, 1, 1, 1, 1),
        padding=((0, 0), (0, 0), (0, 0), (1, 1), (1, 1)),
    )


if __name__ == "__main__":
    key = jax.random.PRNGKey(0)
    # Small shape consistent with the module: N=2, C=4, D=8 (time), H=W=16.
    x = jax.random.normal(key, (2, 4, 8, 16, 16), dtype=jnp.float32)

    y = dvs_pooling_forward(x)
    y = jax.block_until_ready(y)

    y_ref = _reference(x)
    assert y.shape == x.shape
    assert jnp.allclose(y, y_ref), "mismatch vs reference max pool"

    print("KERNEL_OK")
</pallas_src>

<mosaic_0001>
module attributes {stable_mosaic.version = 11 : i64} {
  func.func @_maxpool3x3_flat_kernel(%arg0: i32, %arg1: memref<64x256xf32, #tpu.memory_space<vmem>>, %arg2: memref<64x256xf32, #tpu.memory_space<vmem>>) attributes {dimension_semantics = [#tpu.dimension_semantics<parallel>], iteration_bounds = array<i64: 1>, scalar_prefetch = 0 : i64, scratch_operands = 0 : i64, tpu.core_type = #tpu.core_type<tc>, window_params = [{transform_indices = @transform_0, window_bounds = array<i64: 64, 256>}, {transform_indices = @transform_1, window_bounds = array<i64: 64, 256>}]} {
    %c0 = arith.constant 0 : index
    %c0_0 = arith.constant 0 : index
    %0 = vector.load %arg1[%c0, %c0_0] : memref<64x256xf32, #tpu.memory_space<vmem>>, vector<64x256xf32>
    %1 = tpu.iota {dimensions = array<i32: 1>} : vector<1x256xi32>
    %c16_i32 = arith.constant 16 : i32
    %c0_i32 = arith.constant 0 : i32
    %2 = arith.cmpi eq, %c16_i32, %c0_i32 : i32
    %c1_i32 = arith.constant 1 : i32
    %3 = arith.select %2, %c1_i32, %c16_i32 : i32
    %4 = vector.broadcast %3 : i32 to vector<1x256xi32>
    %5 = arith.remsi %1, %4 : vector<1x256xi32>
    %c0_i32_1 = arith.constant 0 : i32
    %6 = vector.broadcast %c0_i32_1 : i32 to vector<1x256xi32>
    %7 = arith.cmpi ne, %5, %6 : vector<1x256xi32>
    %c0_i32_2 = arith.constant 0 : i32
    %8 = vector.broadcast %c0_i32_2 : i32 to vector<1x256xi32>
    %9 = arith.cmpi slt, %5, %8 : vector<1x256xi32>
    %c0_i32_3 = arith.constant 0 : i32
    %10 = arith.cmpi slt, %3, %c0_i32_3 : i32
    %11 = vector.broadcast %10 : i1 to vector<1x256xi1>
    %12 = vector.broadcast %11 : vector<1x256xi1> to vector<1x256xi1>
    %13 = arith.xori %9, %12 : vector<1x256xi1>
    %14 = arith.andi %13, %7 : vector<1x256xi1>
    %15 = vector.broadcast %3 : i32 to vector<1x256xi32>
    %16 = arith.addi %5, %15 : vector<1x256xi32>
    %17 = arith.select %14, %16, %5 : vector<1x256xi1>, vector<1x256xi32>
    %c0_i32_4 = arith.constant 0 : i32
    %18 = vector.broadcast %c0_i32_4 : i32 to vector<1x256xi32>
    %19 = arith.cmpi sgt, %17, %18 : vector<1x256xi32>
    %c15_i32 = arith.constant 15 : i32
    %20 = vector.broadcast %c15_i32 : i32 to vector<1x256xi32>
    %21 = arith.cmpi slt, %17, %20 : vector<1x256xi32>
    %c16_i32_5 = arith.constant 16 : i32
    %22 = vector.broadcast %c16_i32_5 : i32 to vector<1x256xi32>
    %23 = arith.cmpi sge, %1, %22 : vector<1x256xi32>
    %c240_i32 = arith.constant 240 : i32
    %24 = vector.broadcast %c240_i32 : i32 to vector<1x256xi32>
    %25 = arith.cmpi slt, %1, %24 : vector<1x256xi32>
    %c1_i32_6 = arith.constant 1 : i32
    %26 = tpu.dynamic_rotate %0 by %c1_i32_6 dim 1 : vector<64x256xf32>, i32 -> vector<64x256xf32>
    %c255_i32 = arith.constant 255 : i32
    %27 = tpu.dynamic_rotate %0 by %c255_i32 dim 1 : vector<64x256xf32>, i32 -> vector<64x256xf32>
    %cst = arith.constant 0xFF800000 : f32
    %28 = vector.shape_cast %19 : vector<1x256xi1> to vector<1x256xi1>
    %29 = vector.broadcast %28 : vector<1x256xi1> to vector<64x256xi1>
    %30 = vector.broadcast %cst : f32 to vector<64x256xf32>
    %31 = arith.select %29, %26, %30 : vector<64x256xi1>, vector<64x256xf32>
    %cst_7 = arith.constant 0xFF800000 : f32
    %32 = vector.shape_cast %21 : vector<1x256xi1> to vector<1x256xi1>
    %33 = vector.broadcast %32 : vector<1x256xi1> to vector<64x256xi1>
    %34 = vector.broadcast %cst_7 : f32 to vector<64x256xf32>
    %35 = arith.select %33, %27, %34 : vector<64x256xi1>, vector<64x256xf32>
    %36 = arith.maximumf %31, %35 : vector<64x256xf32>
    %37 = arith.maximumf %0, %36 : vector<64x256xf32>
    %c16_i32_8 = arith.constant 16 : i32
    %38 = tpu.dynamic_rotate %37 by %c16_i32_8 dim 1 : vector<64x256xf32>, i32 -> vector<64x256xf32>
    %c240_i32_9 = arith.constant 240 : i32
    %39 = tpu.dynamic_rotate %37 by %c240_i32_9 dim 1 : vector<64x256xf32>, i32 -> vector<64x256xf32>
    %cst_10 = arith.constant 0xFF800000 : f32
    %40 = vector.shape_cast %23 : vector<1x256xi1> to vector<1x256xi1>
    %41 = vector.broadcast %40 : vector<1x256xi1> to vector<64x256xi1>
    %42 = vector.broadcast %cst_10 : f32 to vector<64x256xf32>
    %43 = arith.select %41, %38, %42 : vector<64x256xi1>, vector<64x256xf32>
    %cst_11 = arith.constant 0xFF800000 : f32
    %44 = vector.shape_cast %25 : vector<1x256xi1> to vector<1x256xi1>
    %45 = vector.broadcast %44 : vector<1x256xi1> to vector<64x256xi1>
    %46 = vector.broadcast %cst_11 : f32 to vector<64x256xf32>
    %47 = arith.select %45, %39, %46 : vector<64x256xi1>, vector<64x256xf32>
    %48 = arith.maximumf %43, %47 : vector<64x256xf32>
    %49 = arith.maximumf %37, %48 : vector<64x256xf32>
    %c0_12 = arith.constant 0 : index
    %c0_13 = arith.constant 0 : index
    %50 = vector.load %arg2[%c0_12, %c0_13] : memref<64x256xf32, #tpu.memory_space<vmem>>, vector<64x256xf32>
    tpu.vector_store %arg2[%c0_12, %c0_13], %49 {strides = array<i32>} : memref<64x256xf32, #tpu.memory_space<vmem>>, vector<64x256xf32>,
    return
  }
  func.func @transform_0(%arg0: i32) -> (i32, i32) {
    %c0_i32 = arith.constant 0 : i32
    %c0_i32_0 = arith.constant 0 : i32
    return %arg0, %c0_i32 : i32, i32
  }
  func.func @transform_1(%arg0: i32) -> (i32, i32) {
    %c0_i32 = arith.constant 0 : i32
    %c0_i32_0 = arith.constant 0 : i32
    return %arg0, %c0_i32 : i32, i32
  }
}

</mosaic_0001>

<llo_original>
// kernel: tpu_custom_call.1
$region0: #{tpu_custom_call.1}
  #allocation0 [shape = 'u32[]', space=smem, size = 0x4, offset = 0x4, fixed_abs, tag = 'smem constant byte address 0x4 - core index']
  #allocation1 [shape = 'u32[72,128]{1,0:T(1,128)}', space=vmem, size = 0x9000, scoped, tag = 'internal scratch']
  %s0 = inlined_call_operand.hbm [shape: f32[64,256], index: 0, kind: input, shape index: {}]
  %s1 = inlined_call_operand.hbm [shape: f32[64,256], index: 1, kind: output, shape index: {}]
  %s2 = sld [smem:[#allocation0]]
  $region18: #{tpu_custom_call.1} parent=0
    _
  %s4 = ssub.s32 1, %s2
  %s5 = scalar_select 0, %s4, %s2
  $region1: #{tpu_custom_call.1} parent=0
    #allocation2 [shape = 'u8[65536]{0}', space=vmem, size = 0x10000, scoped, tag = 'input window, operand 0, single buffered']
    #allocation3 [shape = 's32[1]{0}', space=sflag, size = 0x4, scoped, tag = 'scoped memory for tpu_custom_call.1']
    #allocation4 [shape = 's32[1]{0}', space=sflag, size = 0x4, scoped, tag = 'scoped memory for tpu_custom_call.1']
    #allocation5 [shape = 'u8[65536]{0}', space=vmem, size = 0x10000, scoped, tag = 'output window, operand 0, single buffered']
    %6 = vsyncpa [#allocation3], 0
    %7 = vsyncpa [#allocation4], 0
    // Predicated region
    $region2: #{tpu_custom_call.1} parent=1 // pred_check
      _
    $region3: #{tpu_custom_call.1} parent=1 // pred_check_branch
      %9 = sbr.rel (0) target = $region5
    $region4: #{tpu_custom_call.1} parent=1 // pred_region
      %11 = vsyncadd [#allocation3], 0
      %s12 = sshll.u32 %s0, 4
      %s13 = int_to_ptr.hbm [resolvable:$true] %s12
      %s14 = sshll.u32 [#allocation2], 4
      %s15 = int_to_ptr.vmem [resolvable:$true] %s14
      %20 = dma.hbm_to_vmem [thread:$0]  %s13, 2048, %s15, [#allocation3], 256, 256, 16
    $region5: #{tpu_custom_call.1} parent=1 // pred_fallthru
      _
    // Predicated region
    $region6: #{tpu_custom_call.1} parent=1 // pred_check
      _
    $region7: #{tpu_custom_call.1} parent=1 // pred_check_branch
      %22 = sbr.rel (0) target = $region9
    $region8: #{tpu_custom_call.1} parent=1 // pred_region
      %24 = dma.done [#allocation3], 2048
    $region9: #{tpu_custom_call.1} parent=1 // pred_fallthru
      _
    %v25 = vld [vmem:[#allocation2] sm:$0xff]
    %v26 = vld [vmem:[#allocation2 + $0x8] sm:$0xff]
    %v27 = vld [vmem:[#allocation2 + $0x10] sm:$0xff]
    %v28 = vld [vmem:[#allocation2 + $0x18] sm:$0xff]
    %v29 = vld [vmem:[#allocation2 + $0x20] sm:$0xff]
    %v30 = vld [vmem:[#allocation2 + $0x28] sm:$0xff]
    %v31 = vld [vmem:[#allocation2 + $0x30] sm:$0xff]
    %v32 = vld [vmem:[#allocation2 + $0x38] sm:$0xff]
    %v33 = vld [vmem:[#allocation2 + $0x40] sm:$0xff]
    %v34 = vld [vmem:[#allocation2 + $0x48] sm:$0xff]
    %v35 = vld [vmem:[#allocation2 + $0x50] sm:$0xff]
    %v36 = vld [vmem:[#allocation2 + $0x58] sm:$0xff]
    %v37 = vld [vmem:[#allocation2 + $0x60] sm:$0xff]
    %v38 = vld [vmem:[#allocation2 + $0x68] sm:$0xff]
    %v39 = vld [vmem:[#allocation2 + $0x70] sm:$0xff]
    %v40 = vld [vmem:[#allocation2 + $0x78] sm:$0xff]
    %v41 = vlaneseq
    %v42 = vand.u32 %v41, 127
    %v43 = vadd.s32 %v42, 128
    %vm44 = vcmp.lt.s32.totalorder %v42, 0
    %v45 = vsub.s32 0, %v42
    %v46 = vsel %vm44, %v45, %v42
    %v47 = vshrl.u32 %v46, 4
    %v48 = vand.u32 %v46, 15
    %v49 = vsub.s32 0, %v48
    %v50 = vsel %vm44, %v49, %v48
    %vm51 = vcmp.lt.s32.totalorder %v43, 0
    %v52 = vsub.s32 0, %v43
    %v53 = vsel %vm51, %v52, %v43
    %v54 = vshrl.u32 %v53, 4
    %v55 = vand.u32 %v53, 15
    %v56 = vsub.s32 0, %v55
    %v57 = vsel %vm51, %v56, %v55
    %vm58 = vcmp.ne.s32.totalorder %v50, 0
    %vm59 = vcmp.ne.s32.totalorder %v57, 0
    %vm60 = vcmp.lt.s32.totalorder %v50, 0
    %vm61 = vcmp.lt.s32.totalorder %v57, 0
    %vm62 = vmand %vm60, %vm58
    %vm63 = vmand %vm61, %vm59
    %v64 = vadd.s32 %v50, 16
    %v65 = vadd.s32 %v57, 16
    %v66 = vsel %vm62, %v64, %v50
    %v67 = vsel %vm63, %v65, %v57
    %vm68 = vcmp.gt.s32.totalorder %v66, 0
    %vm69 = vcmp.gt.s32.totalorder %v67, 0
    %vm70 = vcmp.lt.s32.totalorder %v66, 15
    %vm71 = vcmp.lt.s32.totalorder %v67, 15
    %vm72 = vcmp.ge.s32.totalorder %v42, 16
    %vm73 = vcmp.ge.s32.totalorder %v43, 16
    %vm74 = vcmp.lt.s32.totalorder %v42, 240
    %vm75 = vcmp.lt.s32.totalorder %v43, 240
    %76 = vrot.lane.b32.xlu0 %v25, 1
    %v77 = vpop.permute.xlu0 %76
    %78 = vrot.lane.b32.xlu0 %v27, 1
    %v79 = vpop.permute.xlu0 %78
    %80 = vrot.lane.b32.xlu0 %v29, 1
    %v81 = vpop.permute.xlu0 %80
    %82 = vrot.lane.b32.xlu0 %v31, 1
    %v83 = vpop.permute.xlu0 %82
    %84 = vrot.lane.b32.xlu0 %v33, 1
    %v85 = vpop.permute.xlu0 %84
    %86 = vrot.lane.b32.xlu0 %v35, 1
    %v87 = vpop.permute.xlu0 %86
    %88 = vrot.lane.b32.xlu0 %v37, 1
    %v89 = vpop.permute.xlu0 %88
    %90 = vrot.lane.b32.xlu0 %v39, 1
    %v91 = vpop.permute.xlu0 %90
    %92 = vrot.lane.b32.xlu0 %v26, 1
    %v93 = vpop.permute.xlu0 %92
    %94 = vrot.lane.b32.xlu0 %v28, 1
    %v95 = vpop.permute.xlu0 %94
    %96 = vrot.lane.b32.xlu0 %v30, 1
    %v97 = vpop.permute.xlu0 %96
    %98 = vrot.lane.b32.xlu0 %v32, 1
    %v99 = vpop.permute.xlu0 %98
    %100 = vrot.lane.b32.xlu0 %v34, 1
    %v101 = vpop.permute.xlu0 %100
    %102 = vrot.lane.b32.xlu0 %v36, 1
    %v103 = vpop.permute.xlu0 %102
    %104 = vrot.lane.b32.xlu0 %v38, 1
    %v105 = vpop.permute.xlu0 %104
    %106 = vrot.lane.b32.xlu0 %v40, 1
    %v107 = vpop.permute.xlu0 %106
    %vm108 = vcmp.lt.s32.totalorder %v42, 1
    %v109 = vsel %vm108, %v77, %v93
    %v110 = vsel %vm108, %v79, %v95
    %v111 = vsel %vm108, %v81, %v97
    %v112 = vsel %vm108, %v83, %v99
    %v113 = vsel %vm108, %v85, %v101
    %v114 = vsel %vm108, %v87, %v103
    %v115 = vsel %vm108, %v89, %v105
    %v116 = vsel %vm108, %v91, %v107
    %v117 = vsel %vm108, %v93, %v77
    %v118 = vsel %vm108, %v95, %v79
    %v119 = vsel %vm108, %v97, %v81
    %v120 = vsel %vm108, %v99, %v83
    %v121 = vsel %vm108, %v101, %v85
    %v122 = vsel %vm108, %v103, %v87
    %v123 = vsel %vm108, %v105, %v89
    %v124 = vsel %vm108, %v107, %v91
    %125 = vrot.lane.b32.xlu0 %v25, 127
    %v126 = vpop.permute.xlu0 %125
    %127 = vrot.lane.b32.xlu0 %v27, 127
    %v128 = vpop.permute.xlu0 %127
    %129 = vrot.lane.b32.xlu0 %v29, 127
    %v130 = vpop.permute.xlu0 %129
    %131 = vrot.lane.b32.xlu0 %v31, 127
    %v132 = vpop.permute.xlu0 %131
    %133 = vrot.lane.b32.xlu0 %v33, 127
    %v134 = vpop.permute.xlu0 %133
    %135 = vrot.lane.b32.xlu0 %v35, 127
    %v136 = vpop.permute.xlu0 %135
    %137 = vrot.lane.b32.xlu0 %v37, 127
    %v138 = vpop.permute.xlu0 %137
    %139 = vrot.lane.b32.xlu0 %v39, 127
    %v140 = vpop.permute.xlu0 %139
    %141 = vrot.lane.b32.xlu0 %v26, 127
    %v142 = vpop.permute.xlu0 %141
    %143 = vrot.lane.b32.xlu0 %v28, 127
    %v144 = vpop.permute.xlu0 %143
    %145 = vrot.lane.b32.xlu0 %v30, 127
    %v146 = vpop.permute.xlu0 %145
    %147 = vrot.lane.b32.xlu0 %v32, 127
    %v148 = vpop.permute.xlu0 %147
    %149 = vrot.lane.b32.xlu0 %v34, 127
    %v150 = vpop.permute.xlu0 %149
    %151 = vrot.lane.b32.xlu0 %v36, 127
    %v152 = vpop.permute.xlu0 %151
    %153 = vrot.lane.b32.xlu0 %v38, 127
    %v154 = vpop.permute.xlu0 %153
    %155 = vrot.lane.b32.xlu0 %v40, 127
    %v156 = vpop.permute.xlu0 %155
    %vm157 = vcmp.lt.s32.totalorder %v42, 127
    %v158 = vsel %vm157, %v126, %v142
    %v159 = vsel %vm157, %v128, %v144
    %v160 = vsel %vm157, %v130, %v146
    %v161 = vsel %vm157, %v132, %v148
    %v162 = vsel %vm157, %v134, %v150
    %v163 = vsel %vm157, %v136, %v152
    %v164 = vsel %vm157, %v138, %v154
    %v165 = vsel %vm157, %v140, %v156
    %v166 = vsel %vm157, %v142, %v126
    %v167 = vsel %vm157, %v144, %v128
    %v168 = vsel %vm157, %v146, %v130
    %v169 = vsel %vm157, %v148, %v132
    %v170 = vsel %vm157, %v150, %v134
    %v171 = vsel %vm157, %v152, %v136
    %v172 = vsel %vm157, %v154, %v138
    %v173 = vsel %vm157, %v156, %v140
    %v174 = vsel %vm68, 1, 0
    %v175 = vsel %vm69, 1, 0
    %vm176 = vcmp.eq.s32.totalorder %v174, 1
    %vm177 = vcmp.eq.s32.totalorder %v175, 1
    %v178 = vsel %vm176, %v117, -inf
    %v179 = vsel %vm177, %v109, -inf
    %v180 = vsel %vm176, %v118, -inf
    %v181 = vsel %vm177, %v110, -inf
    %v182 = vsel %vm176, %v119, -inf
    %v183 = vsel %vm177, %v111, -inf
    %v184 = vsel %vm176, %v120, -inf
    %v185 = vsel %vm177, %v112, -inf
    %v186 = vsel %vm176, %v121, -inf
    %v187 = vsel %vm177, %v113, -inf
    %v188 = vsel %vm176, %v122, -inf
    %v189 = vsel %vm177, %v114, -inf
    %v190 = vsel %vm176, %v123, -inf
    %v191 = vsel %vm177, %v115, -inf
    %v192 = vsel %vm176, %v124, -inf
    %v193 = vsel %vm177, %v116, -inf
    %v194 = vsel %vm70, 1, 0
    %v195 = vsel %vm71, 1, 0
    %vm196 = vcmp.eq.s32.totalorder %v194, 1
    %vm197 = vcmp.eq.s32.totalorder %v195, 1
    %v198 = vsel %vm196, %v158, -inf
    %v199 = vsel %vm197, %v166, -inf
    %v200 = vsel %vm196, %v159, -inf
    %v201 = vsel %vm197, %v167, -inf
    %v202 = vsel %vm196, %v160, -inf
    %v203 = vsel %vm197, %v168, -inf
    %v204 = vsel %vm196, %v161, -inf
    %v205 = vsel %vm197, %v169, -inf
    %v206 = vsel %vm196, %v162, -inf
    %v207 = vsel %vm197, %v170, -inf
    %v208 = vsel %vm196, %v163, -inf
    %v209 = vsel %vm197, %v171, -inf
    %v210 = vsel %vm196, %v164, -inf
    %v211 = vsel %vm197, %v172, -inf
    %v212 = vsel %vm196, %v165, -inf
    %v213 = vsel %vm197, %v173, -inf
    %v214 = vmax.f32 %v178, %v198
    %v215 = vmax.f32 %v179, %v199
    %v216 = vmax.f32 %v180, %v200
    %v217 = vmax.f32 %v181, %v201
    %v218 = vmax.f32 %v182, %v202
    %v219 = vmax.f32 %v183, %v203
    %v220 = vmax.f32 %v184, %v204
    %v221 = vmax.f32 %v185, %v205
    %v222 = vmax.f32 %v186, %v206
    %v223 = vmax.f32 %v187, %v207
    %v224 = vmax.f32 %v188, %v208
    %v225 = vmax.f32 %v189, %v209
    %v226 = vmax.f32 %v190, %v210
    %v227 = vmax.f32 %v191, %v211
    %v228 = vmax.f32 %v192, %v212
    %v229 = vmax.f32 %v193, %v213
    %v230 = vmax.f32 %v25, %v214
    %v231 = vmax.f32 %v26, %v215
    %v232 = vmax.f32 %v27, %v216
    %v233 = vmax.f32 %v28, %v217
    %v234 = vmax.f32 %v29, %v218
    %v235 = vmax.f32 %v30, %v219
    %v236 = vmax.f32 %v31, %v220
    %v237 = vmax.f32 %v32, %v221
    %v238 = vmax.f32 %v33, %v222
    %v239 = vmax.f32 %v34, %v223
    %v240 = vmax.f32 %v35, %v224
    %v241 = vmax.f32 %v36, %v225
    %v242 = vmax.f32 %v37, %v226
    %v243 = vmax.f32 %v38, %v227
    %v244 = vmax.f32 %v39, %v228
    %v245 = vmax.f32 %v40, %v229
    %246 = vrot.lane.b32.xlu0 %v230, 16
    %v247 = vpop.permute.xlu0 %246
    %248 = vrot.lane.b32.xlu0 %v232, 16
    %v249 = vpop.permute.xlu0 %248
    %250 = vrot.lane.b32.xlu0 %v234, 16
    %v251 = vpop.permute.xlu0 %250
    %252 = vrot.lane.b32.xlu0 %v236, 16
    %v253 = vpop.permute.xlu0 %252
    %254 = vrot.lane.b32.xlu0 %v238, 16
    %v255 = vpop.permute.xlu0 %254
    %256 = vrot.lane.b32.xlu0 %v240, 16
    %v257 = vpop.permute.xlu0 %256
    %258 = vrot.lane.b32.xlu0 %v242, 16
    %v259 = vpop.permute.xlu0 %258
    %260 = vrot.lane.b32.xlu0 %v244, 16
    %v261 = vpop.permute.xlu0 %260
    %262 = vrot.lane.b32.xlu0 %v231, 16
    %v263 = vpop.permute.xlu0 %262
    %264 = vrot.lane.b32.xlu0 %v233, 16
    %v265 = vpop.permute.xlu0 %264
    %266 = vrot.lane.b32.xlu0 %v235, 16
    %v267 = vpop.permute.xlu0 %266
    %268 = vrot.lane.b32.xlu0 %v237, 16
    %v269 = vpop.permute.xlu0 %268
    %270 = vrot.lane.b32.xlu0 %v239, 16
    %v271 = vpop.permute.xlu0 %270
    %272 = vrot.lane.b32.xlu0 %v241, 16
    %v273 = vpop.permute.xlu0 %272
    %274 = vrot.lane.b32.xlu0 %v243, 16
    %v275 = vpop.permute.xlu0 %274
    %276 = vrot.lane.b32.xlu0 %v245, 16
    %v277 = vpop.permute.xlu0 %276
    %vm278 = vcmp.lt.s32.totalorder %v42, 16
    %v279 = vsel %vm278, %v247, %v263
    %v280 = vsel %vm278, %v249, %v265
    %v281 = vsel %vm278, %v251, %v267
    %v282 = vsel %vm278, %v253, %v269
    %v283 = vsel %vm278, %v255, %v271
    %v284 = vsel %vm278, %v257, %v273
    %v285 = vsel %vm278, %v259, %v275
    %v286 = vsel %vm278, %v261, %v277
    %v287 = vsel %vm278, %v263, %v247
    %v288 = vsel %vm278, %v265, %v249
    %v289 = vsel %vm278, %v267, %v251
    %v290 = vsel %vm278, %v269, %v253
    %v291 = vsel %vm278, %v271, %v255
    %v292 = vsel %vm278, %v273, %v257
    %v293 = vsel %vm278, %v275, %v259
    %v294 = vsel %vm278, %v277, %v261
    %295 = vrot.lane.b32.xlu0 %v230, 112
    %v296 = vpop.permute.xlu0 %295
    %297 = vrot.lane.b32.xlu0 %v232, 112
    %v298 = vpop.permute.xlu0 %297
    %299 = vrot.lane.b32.xlu0 %v234, 112
    %v300 = vpop.permute.xlu0 %299
    %301 = vrot.lane.b32.xlu0 %v236, 112
    %v302 = vpop.permute.xlu0 %301
    %303 = vrot.lane.b32.xlu0 %v238, 112
    %v304 = vpop.permute.xlu0 %303
    %305 = vrot.lane.b32.xlu0 %v240, 112
    %v306 = vpop.permute.xlu0 %305
    %307 = vrot.lane.b32.xlu0 %v242, 112
    %v308 = vpop.permute.xlu0 %307
    %309 = vrot.lane.b32.xlu0 %v244, 112
    %v310 = vpop.permute.xlu0 %309
    %311 = vrot.lane.b32.xlu0 %v231, 112
    %v312 = vpop.permute.xlu0 %311
    %313 = vrot.lane.b32.xlu0 %v233, 112
    %v314 = vpop.permute.xlu0 %313
    %315 = vrot.lane.b32.xlu0 %v235, 112
    %v316 = vpop.permute.xlu0 %315
    %317 = vrot.lane.b32.xlu0 %v237, 112
    %v318 = vpop.permute.xlu0 %317
    %319 = vrot.lane.b32.xlu0 %v239, 112
    %v320 = vpop.permute.xlu0 %319
    %321 = vrot.lane.b32.xlu0 %v241, 112
    %v322 = vpop.permute.xlu0 %321
    %323 = vrot.lane.b32.xlu0 %v243, 112
    %v324 = vpop.permute.xlu0 %323
    %325 = vrot.lane.b32.xlu0 %v245, 112
    %v326 = vpop.permute.xlu0 %325
    %vm327 = vcmp.lt.s32.totalorder %v42, 112
    %v328 = vsel %vm327, %v296, %v312
    %v329 = vsel %vm327, %v298, %v314
    %v330 = vsel %vm327, %v300, %v316
    %v331 = vsel %vm327, %v302, %v318
    %v332 = vsel %vm327, %v304, %v320
    %v333 = vsel %vm327, %v306, %v322
    %v334 = vsel %vm327, %v308, %v324
    %v335 = vsel %vm327, %v310, %v326
    %v336 = vsel %vm327, %v312, %v296
    %v337 = vsel %vm327, %v314, %v298
    %v338 = vsel %vm327, %v316, %v300
    %v339 = vsel %vm327, %v318, %v302
    %v340 = vsel %vm327, %v320, %v304
    %v341 = vsel %vm327, %v322, %v306
    %v342 = vsel %vm327, %v324, %v308
    %v343 = vsel %vm327, %v326, %v310
    %v344 = vsel %vm72, 1, 0
    %v345 = vsel %vm73, 1, 0
    %vm346 = vcmp.eq.s32.totalorder %v344, 1
    %vm347 = vcmp.eq.s32.totalorder %v345, 1
    %v348 = vsel %vm346, %v287, -inf
    %v349 = vsel %vm347, %v279, -inf
    %v350 = vsel %vm346, %v288, -inf
    %v351 = vsel %vm347, %v280, -inf
    %v352 = vsel %vm346, %v289, -inf
    %v353 = vsel %vm347, %v281, -inf
    %v354 = vsel %vm346, %v290, -inf
    %v355 = vsel %vm347, %v282, -inf
    %v356 = vsel %vm346, %v291, -inf
    %v357 = vsel %vm347, %v283, -inf
    %v358 = vsel %vm346, %v292, -inf
    %v359 = vsel %vm347, %v284, -inf
    %v360 = vsel %vm346, %v293, -inf
    %v361 = vsel %vm347, %v285, -inf
    %v362 = vsel %vm346, %v294, -inf
    %v363 = vsel %vm347, %v286, -inf
    %v364 = vsel %vm74, 1, 0
    %v365 = vsel %vm75, 1, 0
    %vm366 = vcmp.eq.s32.totalorder %v364, 1
    %vm367 = vcmp.eq.s32.totalorder %v365, 1
    %v368 = vsel %vm366, %v328, -inf
    %v369 = vsel %vm367, %v336, -inf
    %v370 = vsel %vm366, %v329, -inf
    %v371 = vsel %vm367, %v337, -inf
    %v372 = vsel %vm366, %v330, -inf
    %v373 = vsel %vm367, %v338, -inf
    %v374 = vsel %vm366, %v331, -inf
    %v375 = vsel %vm367, %v339, -inf
    %v376 = vsel %vm366, %v332, -inf
    %v377 = vsel %vm367, %v340, -inf
    %v378 = vsel %vm366, %v333, -inf
    %v379 = vsel %vm367, %v341, -inf
    %v380 = vsel %vm366, %v334, -inf
    %v381 = vsel %vm367, %v342, -inf
    %v382 = vsel %vm366, %v335, -inf
    %v383 = vsel %vm367, %v343, -inf
    %v384 = vmax.f32 %v348, %v368
    %v385 = vmax.f32 %v349, %v369
    %v386 = vmax.f32 %v350, %v370
    %v387 = vmax.f32 %v351, %v371
    %v388 = vmax.f32 %v352, %v372
    %v389 = vmax.f32 %v353, %v373
    %v390 = vmax.f32 %v354, %v374
    %v391 = vmax.f32 %v355, %v375
    %v392 = vmax.f32 %v356, %v376
    %v393 = vmax.f32 %v357, %v377
    %v394 = vmax.f32 %v358, %v378
    %v395 = vmax.f32 %v359, %v379
    %v396 = vmax.f32 %v360, %v380
    %v397 = vmax.f32 %v361, %v381
    %v398 = vmax.f32 %v362, %v382
    %v399 = vmax.f32 %v363, %v383
    %v400 = vmax.f32 %v230, %v384
    %v401 = vmax.f32 %v231, %v385
    %v402 = vmax.f32 %v232, %v386
    %v403 = vmax.f32 %v233, %v387
    %v404 = vmax.f32 %v234, %v388
    %v405 = vmax.f32 %v235, %v389
    %v406 = vmax.f32 %v236, %v390
    %v407 = vmax.f32 %v237, %v391
    %v408 = vmax.f32 %v238, %v392
    %v409 = vmax.f32 %v239, %v393
    %v410 = vmax.f32 %v240, %v394
    %v411 = vmax.f32 %v241, %v395
    %v412 = vmax.f32 %v242, %v396
    %v413 = vmax.f32 %v243, %v397
    %v414 = vmax.f32 %v244, %v398
    %v415 = vmax.f32 %v245, %v399
    %416 = vst [vmem:[#allocation5] sm:$0xff] %v400
    %417 = vst [vmem:[#allocation5 + $0x8] sm:$0xff] %v401
    %418 = vst [vmem:[#allocation5 + $0x10] sm:$0xff] %v402
    %419 = vst [vmem:[#allocation5 + $0x18] sm:$0xff] %v403
    %420 = vst [vmem:[#allocation5 + $0x20] sm:$0xff] %v404
    %421 = vst [vmem:[#allocation5 + $0x28] sm:$0xff] %v405
    %422 = vst [vmem:[#allocation5 + $0x30] sm:$0xff] %v406
    %423 = vst [vmem:[#allocation5 + $0x38] sm:$0xff] %v407
    %424 = vst [vmem:[#allocation5 + $0x40] sm:$0xff] %v408
    %425 = vst [vmem:[#allocation5 + $0x48] sm:$0xff] %v409
    %426 = vst [vmem:[#allocation5 + $0x50] sm:$0xff] %v410
    %427 = vst [vmem:[#allocation5 + $0x58] sm:$0xff] %v411
    %428 = vst [vmem:[#allocation5 + $0x60] sm:$0xff] %v412
    %429 = vst [vmem:[#allocation5 + $0x68] sm:$0xff] %v413
    %430 = vst [vmem:[#allocation5 + $0x70] sm:$0xff] %v414
    %431 = vst [vmem:[#allocation5 + $0x78] sm:$0xff] %v415
    // Predicated region
    $region10: #{tpu_custom_call.1} parent=1 // pred_check
      _
    $region11: #{tpu_custom_call.1} parent=1 // pred_check_branch
      %433 = sbr.rel (0) target = $region13
    $region12: #{tpu_custom_call.1} parent=1 // pred_region
      %435 = vsyncadd [#allocation4], 0
      %s436 = sshll.u32 [#allocation5], 4
      %s437 = int_to_ptr.vmem [resolvable:$true] %s436
      %s438 = sshll.u32 %s1, 4
      %s439 = int_to_ptr.hbm [resolvable:$true] %s438
      %444 = dma.vmem_to_hbm [thread:$0]  %s437, 2048, %s439, [#allocation4], 256, 256, 16
    $region13: #{tpu_custom_call.1} parent=1 // pred_fallthru
      _
    // Predicated region
    $region14: #{tpu_custom_call.1} parent=1 // pred_check
      _
    $region15: #{tpu_custom_call.1} parent=1 // pred_check_branch
      %446 = sbr.rel (0) target = $region17
    $region16: #{tpu_custom_call.1} parent=1 // pred_region
      %448 = dma.done [#allocation4], 2048
    $region17: #{tpu_custom_call.1} parent=1 // pred_fallthru
      _
    %449 = vsyncpa [#allocation3], 1
    %450 = vsyncpa [#allocation4], 1

</llo_original>
